<compile_context>
chip_gen: v6e
topology: v6e:2x2x1
jax: 0.10.0
libtpu: 0.0.40
codegen_flags: <defaults>
</compile_context>

<pallas_src>
import jax
import jax.numpy as jnp
from jax.experimental import pallas as pl
from jax.experimental.pallas import tpu as pltpu


def _fusion_kernel(w_ref, x_ref, o_ref):
    # w_ref: SMEM (M,)        softmax-normalized modality weights
    # x_ref: VMEM (M, TN, D)  batch-row tile of all modalities
    # o_ref: VMEM (TN, M*D)   lane-dense slab of the concatenated output
    M, TN, D = x_ref.shape

    def scaled(m):
        x = x_ref[m]                                     # (TN, D) f32
        sq = jnp.sum(x * x, axis=-1, keepdims=True)      # (TN, 1)
        # F.normalize: x / max(||x||, 1e-12) == x * rsqrt(max(||x||^2, 1e-24))
        scale = w_ref[m] * jax.lax.rsqrt(jnp.maximum(sq, 1e-24))
        return (x * scale).astype(o_ref.dtype)

    if D % 128 == 0:
        # 128-aligned per-modality columns -> each store is unmasked / lane-dense.
        for m in range(M):                               # static, small M
            o_ref[:, m * D:(m + 1) * D] = scaled(m)
    else:
        # Non-aligned modality width: build the whole slab, store once.
        o_ref[...] = jnp.concatenate([scaled(m) for m in range(M)], axis=-1)


def _vmem_budgets():
    """Generation-aware (buffer_budget, vmem_limit) in bytes."""
    try:
        cap = int(pltpu.get_tpu_info().vmem_capacity_bytes)
    except Exception:
        cap = 64 * 1024 * 1024                           # conservative fallback
    # Budget for the 2-in + 2-out double buffers; leave headroom for Mosaic
    # internal scratch.  v5e/v6e (128 MiB): 32 MiB.  v7x (64 MiB): ~21 MiB.
    buffer_budget = min(cap // 3, 32 * 1024 * 1024)
    vmem_limit = min(2 * buffer_budget, (cap * 3) // 4)
    return buffer_budget, vmem_limit


def _pick_row_tile(N, M, D, itemsize, buffer_budget, max_rows=1024):
    """Row-tile TN: multiple of 8, fits 2 input + 2 output double buffers of
    M*TN*D elements in `buffer_budget`, capped at `max_rows`, and ≤ ceil(N/2)
    whenever N allows ≥2 grid steps (megacore sharding on v7x)."""
    if N <= 8:
        return N                                          # full extent (allowed)
    bytes_per_row = 4 * M * D * itemsize                  # 4 buffers per TN row
    cap = buffer_budget // max(bytes_per_row, 1)
    cap = max(8, (cap // 8) * 8)                          # sublane multiple
    tn = min(cap, max_rows)
    tn = min(tn, ((N + 7) // 8) * 8)                      # never exceed padded N
    if tn >= N:                                           # force ≥2 grid steps
        half = ((pl.cdiv(N, 2) + 7) // 8) * 8
        tn = max(8, min(tn, half))
    return tn


def multimodal_fusion(embs_stacked, weight):
    """embs_stacked: (M, N, D) float32; weight: (M, 1) float32 (the nn.Parameter)."""
    M, N, D = embs_stacked.shape
    # Tiny (M,)-sized softmax is parameter glue; done in plain JAX.
    weight_norm = jax.nn.softmax(weight.reshape(M), axis=0)   # (M,)

    itemsize = jnp.dtype(embs_stacked.dtype).itemsize
    buffer_budget, vmem_limit = _vmem_budgets()
    TN = _pick_row_tile(N, M, D, itemsize, buffer_budget)
    grid = (pl.cdiv(N, TN),)                               # ragged edge handled by Pallas

    cost = pl.CostEstimate(
        flops=3 * M * N * D,                      # square + sum + scale-mul
        transcendentals=M * N,                    # rsqrt per row per modality
        bytes_accessed=2 * M * N * D * itemsize,  # read + write of all embeddings
    )

    out = pl.pallas_call(
        _fusion_kernel,
        out_shape=jax.ShapeDtypeStruct((N, M * D), embs_stacked.dtype),
        grid=grid,
        in_specs=[
            # weights: whole (M,) array resident in SMEM
            pl.BlockSpec(memory_space=pltpu.MemorySpace.SMEM),
            # one batch-row tile of every modality per grid step
            pl.BlockSpec((M, TN, D), lambda n: (0, n, 0)),
        ],
        # lane-dense concatenated output slab (TN, M*D)
        out_specs=pl.BlockSpec((TN, M * D), lambda n: (n, 0)),
        compiler_params=pltpu.CompilerParams(
            dimension_semantics=("parallel",),
            vmem_limit_bytes=int(vmem_limit),
        ),
        cost_estimate=cost,
    )(weight_norm, embs_stacked)
    return out


def _reference(embs_stacked, weight):
    wn = jax.nn.softmax(weight, axis=0)                   # (M, 1)
    M = embs_stacked.shape[0]
    outs = []
    for i in range(M):
        x = embs_stacked[i]
        norm = jnp.maximum(jnp.sqrt(jnp.sum(x * x, axis=-1, keepdims=True)), 1e-12)
        outs.append(wn[i] * (x / norm))
    return jnp.concatenate(outs, axis=1)


if __name__ == "__main__":
    modal_num = 3
    N, D = 8, 128                                         # batch, per-modality embedding dim

    key = jax.random.PRNGKey(0)
    embs_stacked = jax.random.normal(key, (modal_num, N, D), dtype=jnp.float32)

    # Deterministic parameter init exactly as in __init__: torch.ones((modal_num, 1))
    weight = jnp.ones((modal_num, 1), dtype=jnp.float32)

    joint = multimodal_fusion(embs_stacked, weight)
    joint = jax.block_until_ready(joint)

    ref = _reference(embs_stacked, weight)
    assert joint.shape == (N, modal_num * D)
    assert jnp.allclose(joint, ref, atol=1e-6, rtol=1e-6)
    print("KERNEL_OK")
</pallas_src>

<mosaic_0001>
module attributes {stable_mosaic.version = 11 : i64} {
  func.func @_fusion_kernel(%arg0: i32, %arg1: memref<3xf32, #tpu.memory_space<smem>>, %arg2: memref<3x8x128xf32, #tpu.memory_space<vmem>>, %arg3: memref<8x384xf32, #tpu.memory_space<vmem>>) attributes {dimension_semantics = [#tpu.dimension_semantics<parallel>], iteration_bounds = array<i64: 1>, scalar_prefetch = 0 : i64, scratch_operands = 0 : i64, tpu.core_type = #tpu.core_type<tc>, window_params = [{transform_indices = @transform_0, window_bounds = array<i64: 3>}, {transform_indices = @transform_1, window_bounds = array<i64: 3, 8, 128>}, {transform_indices = @transform_2, window_bounds = array<i64: 8, 384>}]} {
    %c0 = arith.constant 0 : index
    %c0_0 = arith.constant 0 : index
    %c0_1 = arith.constant 0 : index
    %0 = vector.load %arg2[%c0, %c0_0, %c0_1] : memref<3x8x128xf32, #tpu.memory_space<vmem>>, vector<1x8x128xf32>
    %1 = vector.shape_cast %0 : vector<1x8x128xf32> to vector<8x128xf32>
    %2 = arith.mulf %1, %1 : vector<8x128xf32>
    %cst = arith.constant dense<0.000000e+00> : vector<8xf32>
    %3 = vector.multi_reduction <add>, %2, %cst [1] : vector<8x128xf32> to vector<8xf32>
    %4 = vector.shape_cast %3 : vector<8xf32> to vector<8x1xf32>
    %c0_2 = arith.constant 0 : index
    %5 = memref.load %arg1[%c0_2] : memref<3xf32, #tpu.memory_space<smem>>
    %cst_3 = arith.constant 1.000000e-24 : f32
    %6 = vector.broadcast %cst_3 : f32 to vector<8x1xf32>
    %7 = arith.maximumf %4, %6 : vector<8x1xf32>
    %8 = math.rsqrt %7 : vector<8x1xf32>
    %9 = vector.broadcast %5 : f32 to vector<8x1xf32>
    %10 = arith.mulf %9, %8 : vector<8x1xf32>
    %11 = vector.broadcast %10 : vector<8x1xf32> to vector<8x128xf32>
    %12 = arith.mulf %1, %11 : vector<8x128xf32>
    %c0_4 = arith.constant 0 : index
    %c0_5 = arith.constant 0 : index
    %13 = vector.load %arg3[%c0_4, %c0_5] : memref<8x384xf32, #tpu.memory_space<vmem>>, vector<8x128xf32>
    tpu.vector_store %arg3[%c0_4, %c0_5], %12 {strides = array<i32>} : memref<8x384xf32, #tpu.memory_space<vmem>>, vector<8x128xf32>,
    %c1 = arith.constant 1 : index
    %c0_6 = arith.constant 0 : index
    %c0_7 = arith.constant 0 : index
    %14 = vector.load %arg2[%c1, %c0_6, %c0_7] : memref<3x8x128xf32, #tpu.memory_space<vmem>>, vector<1x8x128xf32>
    %15 = vector.shape_cast %14 : vector<1x8x128xf32> to vector<8x128xf32>
    %16 = arith.mulf %15, %15 : vector<8x128xf32>
    %cst_8 = arith.constant dense<0.000000e+00> : vector<8xf32>
    %17 = vector.multi_reduction <add>, %16, %cst_8 [1] : vector<8x128xf32> to vector<8xf32>
    %18 = vector.shape_cast %17 : vector<8xf32> to vector<8x1xf32>
    %c1_9 = arith.constant 1 : index
    %19 = memref.load %arg1[%c1_9] : memref<3xf32, #tpu.memory_space<smem>>
    %cst_10 = arith.constant 1.000000e-24 : f32
    %20 = vector.broadcast %cst_10 : f32 to vector<8x1xf32>
    %21 = arith.maximumf %18, %20 : vector<8x1xf32>
    %22 = math.rsqrt %21 : vector<8x1xf32>
    %23 = vector.broadcast %19 : f32 to vector<8x1xf32>
    %24 = arith.mulf %23, %22 : vector<8x1xf32>
    %25 = vector.broadcast %24 : vector<8x1xf32> to vector<8x128xf32>
    %26 = arith.mulf %15, %25 : vector<8x128xf32>
    %c0_11 = arith.constant 0 : index
    %c128 = arith.constant 128 : index
    %27 = vector.load %arg3[%c0_11, %c128] : memref<8x384xf32, #tpu.memory_space<vmem>>, vector<8x128xf32>
    tpu.vector_store %arg3[%c0_11, %c128], %26 {strides = array<i32>} : memref<8x384xf32, #tpu.memory_space<vmem>>, vector<8x128xf32>,
    %c2 = arith.constant 2 : index
    %c0_12 = arith.constant 0 : index
    %c0_13 = arith.constant 0 : index
    %28 = vector.load %arg2[%c2, %c0_12, %c0_13] : memref<3x8x128xf32, #tpu.memory_space<vmem>>, vector<1x8x128xf32>
    %29 = vector.shape_cast %28 : vector<1x8x128xf32> to vector<8x128xf32>
    %30 = arith.mulf %29, %29 : vector<8x128xf32>
    %cst_14 = arith.constant dense<0.000000e+00> : vector<8xf32>
    %31 = vector.multi_reduction <add>, %30, %cst_14 [1] : vector<8x128xf32> to vector<8xf32>
    %32 = vector.shape_cast %31 : vector<8xf32> to vector<8x1xf32>
    %c2_15 = arith.constant 2 : index
    %33 = memref.load %arg1[%c2_15] : memref<3xf32, #tpu.memory_space<smem>>
    %cst_16 = arith.constant 1.000000e-24 : f32
    %34 = vector.broadcast %cst_16 : f32 to vector<8x1xf32>
    %35 = arith.maximumf %32, %34 : vector<8x1xf32>
    %36 = math.rsqrt %35 : vector<8x1xf32>
    %37 = vector.broadcast %33 : f32 to vector<8x1xf32>
    %38 = arith.mulf %37, %36 : vector<8x1xf32>
    %39 = vector.broadcast %38 : vector<8x1xf32> to vector<8x128xf32>
    %40 = arith.mulf %29, %39 : vector<8x128xf32>
    %c0_17 = arith.constant 0 : index
    %c256 = arith.constant 256 : index
    %41 = vector.load %arg3[%c0_17, %c256] : memref<8x384xf32, #tpu.memory_space<vmem>>, vector<8x128xf32>
    tpu.vector_store %arg3[%c0_17, %c256], %40 {strides = array<i32>} : memref<8x384xf32, #tpu.memory_space<vmem>>, vector<8x128xf32>,
    return
  }
  func.func @transform_0(%arg0: i32) -> i32 {
    %c0_i32 = arith.constant 0 : i32
    %c0_i32_0 = arith.constant 0 : i32
    return %c0_i32 : i32
  }
  func.func @transform_1(%arg0: i32) -> (i32, i32, i32) {
    %c0_i32 = arith.constant 0 : i32
    %c0_i32_0 = arith.constant 0 : i32
    %c0_i32_1 = arith.constant 0 : i32
    return %c0_i32, %arg0, %c0_i32_0 : i32, i32, i32
  }
  func.func @transform_2(%arg0: i32) -> (i32, i32) {
    %c0_i32 = arith.constant 0 : i32
    %c0_i32_0 = arith.constant 0 : i32
    return %arg0, %c0_i32 : i32, i32
  }
}

</mosaic_0001>

<llo_original>
// kernel: tpu_custom_call.1
$region0: #{tpu_custom_call.1}
  #allocation0 [shape = 'u32[]', space=smem, size = 0x4, offset = 0x4, fixed_abs, tag = 'smem constant byte address 0x4 - core index']
  #allocation1 [shape = 'u32[144,128]{1,0:T(1,128)}', space=vmem, size = 0x12000, scoped, tag = 'internal scratch']
  %s0 = inlined_call_operand.hbm [shape: f32[3], index: 0, kind: input, shape index: {}]
  %s1 = inlined_call_operand.hbm [shape: f32[3,8,128], index: 1, kind: input, shape index: {}]
  %s2 = inlined_call_operand.hbm [shape: f32[8,384], index: 2, kind: output, shape index: {}]
  %s3 = sld [smem:[#allocation0]]
  $region26: #{tpu_custom_call.1} parent=0
    _
  %s5 = ssub.s32 1, %s3
  %s6 = scalar_select 0, %s5, %s3
  $region1: #{tpu_custom_call.1} parent=0
    #allocation2 [shape = 'u8[512]{0}', space=smem, size = 0x200, scoped, tag = 'input window, operand 0, single buffered']
    #allocation3 [shape = 's32[1]{0}', space=sflag, size = 0x4, scoped, tag = 'scoped memory for tpu_custom_call.1']
    #allocation4 [shape = 's32[1]{0}', space=sflag, size = 0x4, scoped, tag = 'scoped memory for tpu_custom_call.1']
    #allocation5 [shape = 's32[1]{0}', space=sflag, size = 0x4, scoped, tag = 'scoped memory for tpu_custom_call.1']
    #allocation6 [shape = 'u8[12288]{0}', space=vmem, size = 0x3000, scoped, tag = 'input window, operand 1, single buffered']
    #allocation7 [shape = 'u8[12288]{0}', space=vmem, size = 0x3000, scoped, tag = 'output window, operand 0, single buffered']
    %7 = vsyncpa [#allocation5], 0
    %8 = vsyncpa [#allocation3], 0
    %9 = vsyncpa [#allocation4], 0
    // Predicated region
    $region2: #{tpu_custom_call.1} parent=1 // pred_check
      _
    $region3: #{tpu_custom_call.1} parent=1 // pred_check_branch
      %11 = sbr.rel (0) target = $region5
    $region4: #{tpu_custom_call.1} parent=1 // pred_region
      %s13 = ssub.s32 16, 16
      %14 = vsyncadd [#allocation5], %s13
      %17 = dma.hbm_to_smem %s0, 16, [#allocation2], [#allocation5]
    $region5: #{tpu_custom_call.1} parent=1 // pred_fallthru
      _
    // Predicated region
    $region6: #{tpu_custom_call.1} parent=1 // pred_check
      _
    $region7: #{tpu_custom_call.1} parent=1 // pred_check_branch
      %19 = sbr.rel (0) target = $region9
    $region8: #{tpu_custom_call.1} parent=1 // pred_region
      %s21 = ssub.s32 384, 384
      %22 = vsyncadd [#allocation3], %s21
      %s23 = sshll.u32 [#allocation6], 4
      %s24 = int_to_ptr.vmem [resolvable:$true] %s23
      %29 = dma.hbm_to_vmem [thread:$0]  %s1, 384, %s24, [#allocation3], 128, 128, 8
    $region9: #{tpu_custom_call.1} parent=1 // pred_fallthru
      _
    // Predicated region
    $region10: #{tpu_custom_call.1} parent=1 // pred_check
      _
    $region11: #{tpu_custom_call.1} parent=1 // pred_check_branch
      %31 = sbr.rel (0) target = $region13
    $region12: #{tpu_custom_call.1} parent=1 // pred_region
      %32 = dma.done [#allocation5], 16
    $region13: #{tpu_custom_call.1} parent=1 // pred_fallthru
      _
    // Predicated region
    $region14: #{tpu_custom_call.1} parent=1 // pred_check
      _
    $region15: #{tpu_custom_call.1} parent=1 // pred_check_branch
      %34 = sbr.rel (0) target = $region17
    $region16: #{tpu_custom_call.1} parent=1 // pred_region
      %35 = dma.done [#allocation3], 384
    $region17: #{tpu_custom_call.1} parent=1 // pred_fallthru
      _
    %36 = sfence
    %v37 = vld [vmem:[#allocation6] sm:$0xff]
    %v38 = vmul.f32 %v37, %v37
    %39 = vadd.xlane.f32.xlu0 %v38
    %v40 = vpop.xlane.xlu0 %39
    %s41 = sld [smem:[#allocation2]]
    %v42 = vmax.f32 %v40, 1e-24
    %v43 = vrsqrt.pop %v42
    %v44 = vstv %s41
    %v45 = vmul.f32 %v44, %v43
    %v46 = vmul.f32 %v37, %v45
    %47 = vst [vmem:[#allocation7] sm:$0xff] %v46
    %s48 = scalar_lea.vmem [#allocation6], 8
    %v49 = vld [vmem:[%s48] sm:$0xff]
    %v50 = vmul.f32 %v49, %v49
    %51 = vadd.xlane.f32.xlu0 %v50
    %v52 = vpop.xlane.xlu0 %51
    %s53 = sld [smem:[#allocation2 + $0x1]]
    %v54 = vmax.f32 %v52, 1e-24
    %v55 = vrsqrt.pop %v54
    %v56 = vstv %s53
    %v57 = vmul.f32 %v56, %v55
    %v58 = vmul.f32 %v49, %v57
    %59 = vst [vmem:[#allocation7 + $0x8] sm:$0xff] %v58
    %s60 = scalar_lea.vmem [#allocation6], 16
    %v61 = vld [vmem:[%s60] sm:$0xff]
    %v62 = vmul.f32 %v61, %v61
    %63 = vadd.xlane.f32.xlu0 %v62
    %v64 = vpop.xlane.xlu0 %63
    %s65 = sld [smem:[#allocation2 + $0x2]]
    %v66 = vmax.f32 %v64, 1e-24
    %v67 = vrsqrt.pop %v66
    %v68 = vstv %s65
    %v69 = vmul.f32 %v68, %v67
    %v70 = vmul.f32 %v61, %v69
    %71 = vst [vmem:[#allocation7 + $0x10] sm:$0xff] %v70
    // Predicated region
    $region18: #{tpu_custom_call.1} parent=1 // pred_check
      _
    $region19: #{tpu_custom_call.1} parent=1 // pred_check_branch
      %73 = sbr.rel (0) target = $region21
    $region20: #{tpu_custom_call.1} parent=1 // pred_region
      %s75 = ssub.s32 384, 384
      %76 = vsyncadd [#allocation4], %s75
      %s78 = sshll.u32 [#allocation7], 4
      %s79 = int_to_ptr.vmem [resolvable:$true] %s78
      %81 = dma.vmem_to_hbm [thread:$0]  %s79, 384, %s2, [#allocation4]
    $region21: #{tpu_custom_call.1} parent=1 // pred_fallthru
      _
    // Predicated region
    $region22: #{tpu_custom_call.1} parent=1 // pred_check
      _
    $region23: #{tpu_custom_call.1} parent=1 // pred_check_branch
      %83 = sbr.rel (0) target = $region25
    $region24: #{tpu_custom_call.1} parent=1 // pred_region
      %84 = dma.done [#allocation4], 384
    $region25: #{tpu_custom_call.1} parent=1 // pred_fallthru
      _
    %85 = vsyncpa [#allocation3], 1
    %86 = vsyncpa [#allocation4], 1
    %87 = vsyncpa [#allocation5], 1

</llo_original>
